<compile_context>
chip_gen: v6e
topology: v6e:2x2x1
jax: 0.10.0
libtpu: 0.0.40
codegen_flags: <defaults>
</compile_context>

<pallas_src>
import math

import jax
import jax.numpy as jnp
from jax.experimental import pallas as pl
from jax.experimental.pallas import tpu as pltpu

IN_NODE = 5
N_BLKS = 4
BN_EPS = 1e-5
LANES = 128  # padded feature width (max real feature dim is 80)


def _block_dims(in_node=IN_NODE, n_blks=N_BLKS):
    """(in_features, out_features) for the 8 Linear+GELU+BN blocks."""
    dims = []
    for i in range(n_blks):
        dims.append((in_node * 2 ** i, in_node * 2 ** (i + 1)))
    for i in range(n_blks - 1, -1, -1):
        dims.append((in_node * 2 ** (i + 1), in_node * 2 ** i))
    return dims


def _gelu_exact(x):
    # torch nn.GELU() default: exact erf-based GELU.
    return 0.5 * x * (1.0 + jax.lax.erf(x * (1.0 / math.sqrt(2.0))))


def _make_kernel(n_blocks, batch):
    inv_b = 1.0 / float(batch)
    fc_slot = n_blocks % 2  # slot the fc weight tile lands in (static)

    def kernel(x_ref, w_hbm, p_ref, out_ref, act_ref, wbuf, sem):
        # x_ref:   (B, 128) f32                zero-padded input (VMEM)
        # w_hbm:   (n_blocks+1, 128, 128) bf16 zero-padded weights (HBM, manual DMA)
        # p_ref:   (n_blocks+1, 3, 128) f32    rows [bias, gamma, beta] per block
        #                                      (fc entry uses row 0 only)
        # out_ref: (B, 128) f32                lane-dense output (cols >= 2 are 0)
        # act_ref: (B, 128) f32                VMEM activation scratch
        # wbuf:    (2, 128, 128) bf16          VMEM weight double buffer
        # sem:     (2,)                        DMA semaphores

        # Prime the weight pipeline: block 0 -> slot 0.
        pltpu.make_async_copy(w_hbm.at[0], wbuf.at[0], sem.at[0]).start()

        act_ref[...] = x_ref[...]

        @pl.loop(0, n_blocks)
        def _(blk):
            slot = blk % 2
            nxt = 1 - slot
            # Wait for this block's weights, then immediately prefetch the next
            # weight tile (next block, or the final fc when blk == n_blocks-1).
            pltpu.make_async_copy(w_hbm.at[blk], wbuf.at[slot], sem.at[slot]).wait()
            pltpu.make_async_copy(w_hbm.at[blk + 1], wbuf.at[nxt], sem.at[nxt]).start()

            pg = p_ref[blk]                    # (3, 128) f32
            b = pg[0:1, :]
            gamma = pg[1:2, :]
            beta = pg[2:3, :]

            # Linear + exact GELU (padded lanes stay exactly zero).
            x = act_ref[...]
            w = wbuf[slot].astype(jnp.float32)
            h = jnp.dot(x, w, preferred_element_type=jnp.float32) + b
            h = _gelu_exact(h)

            # BatchNorm1d (training mode): single-pass sum / sum-of-squares,
            # folded into one scale/shift FMA. Padded lanes stay zero because
            # gamma/beta are zero-padded.
            s = jnp.sum(h, axis=0, keepdims=True)
            ss = jnp.sum(h * h, axis=0, keepdims=True)
            mean = s * inv_b
            var = jnp.maximum(ss * inv_b - mean * mean, 0.0)
            scale = gamma * jax.lax.rsqrt(var + BN_EPS)
            shift = beta - mean * scale
            act_ref[...] = h * scale + shift

        # Final fc: its weight tile was prefetched during the last loop step.
        pltpu.make_async_copy(w_hbm.at[n_blocks], wbuf.at[fc_slot],
                              sem.at[fc_slot]).wait()
        w_fc = wbuf[fc_slot].astype(jnp.float32)
        b_fc = p_ref[n_blocks][0:1, :]
        out_ref[...] = jnp.dot(act_ref[...], w_fc,
                               preferred_element_type=jnp.float32) + b_fc

    return kernel


def init_params(key, in_node=IN_NODE, n_blks=N_BLKS):
    """Deterministic synthetic parameters (PyTorch-Linear-like uniform init)."""
    dims = _block_dims(in_node, n_blks)
    params = []
    for (fin, fout) in dims:
        key, kw, kb = jax.random.split(key, 3)
        bound = 1.0 / math.sqrt(fin)
        w = jax.random.uniform(kw, (fin, fout), jnp.float32, -bound, bound)
        b = jax.random.uniform(kb, (1, fout), jnp.float32, -bound, bound)
        gamma = jnp.ones((1, fout), jnp.float32)
        beta = jnp.zeros((1, fout), jnp.float32)
        params += [w, b, gamma, beta]
    key, kw, kb = jax.random.split(key, 3)
    bound = 1.0 / math.sqrt(in_node)
    w_fc = jax.random.uniform(kw, (in_node, 2), jnp.float32, -bound, bound)
    b_fc = jax.random.uniform(kb, (1, 2), jnp.float32, -bound, bound)
    params += [w_fc, b_fc]
    return params


def pack_params(params, in_node=IN_NODE, n_blks=N_BLKS):
    """Pack the 26 small tensors into two zero-padded slabs (one-time, host).

    Returns:
      W: (n_blocks+1, 128, 128) bfloat16 weight slab (kept in HBM by the kernel)
      P: (n_blocks+1, 3, 128) float32 slab with rows [bias, gamma, beta]
    """
    dims = _block_dims(in_node, n_blks)
    n_blocks = len(dims)
    W = jnp.zeros((n_blocks + 1, LANES, LANES), jnp.float32)
    P = jnp.zeros((n_blocks + 1, 3, LANES), jnp.float32)
    idx = 0
    for blk, (fin, fout) in enumerate(dims):
        w, b, gamma, beta = params[idx:idx + 4]
        idx += 4
        W = W.at[blk, :fin, :fout].set(w)
        P = P.at[blk, 0, :fout].set(b.reshape(-1))
        P = P.at[blk, 1, :fout].set(gamma.reshape(-1))
        P = P.at[blk, 2, :fout].set(beta.reshape(-1))
    w_fc, b_fc = params[idx], params[idx + 1]
    W = W.at[n_blocks, :in_node, :2].set(w_fc)
    P = P.at[n_blocks, 0, :2].set(b_fc.reshape(-1))
    return W.astype(jnp.bfloat16), P


def simple_spi10_pallas(x, W, P):
    """Jittable forward: takes pre-packed (bf16 W, f32 P) device-resident slabs."""
    dims = _block_dims()
    n_blocks = len(dims)
    batch, feat = x.shape

    x_pad = jnp.zeros((batch, LANES), jnp.float32).at[:, :feat].set(
        x.astype(jnp.float32))

    kernel = _make_kernel(n_blocks, batch)
    vmem = pl.BlockSpec(memory_space=pltpu.MemorySpace.VMEM)
    hbm = pl.BlockSpec(memory_space=pl.ANY)

    flops = sum(2 * batch * fi * fo for fi, fo in dims) + 2 * batch * IN_NODE * 2
    transcendentals = sum(batch * fo for _, fo in dims)  # one erf per GELU element
    bytes_accessed = 4 * x_pad.size + 2 * W.size + 4 * P.size + 4 * batch * LANES

    out_pad = pl.pallas_call(
        kernel,
        out_shape=jax.ShapeDtypeStruct((batch, LANES), jnp.float32),
        in_specs=[vmem, hbm, vmem],
        out_specs=vmem,
        scratch_shapes=[
            pltpu.VMEM((batch, LANES), jnp.float32),       # activation scratch
            pltpu.VMEM((2, LANES, LANES), jnp.bfloat16),   # weight double buffer
            pltpu.SemaphoreType.DMA((2,)),
        ],
        cost_estimate=pl.CostEstimate(
            flops=flops,
            transcendentals=transcendentals,
            bytes_accessed=bytes_accessed,
        ),
    )(x_pad, W, P)
    return out_pad[:, :2]


def _round_linear_weights_to_bf16(params):
    """Apply the same bf16 rounding to the linear weights that the W slab uses."""
    n_blocks = len(_block_dims())
    out, idx = [], 0
    for _ in range(n_blocks):
        w, b, g, be = params[idx:idx + 4]
        idx += 4
        out += [w.astype(jnp.bfloat16).astype(jnp.float32), b, g, be]
    w_fc, b_fc = params[idx], params[idx + 1]
    out += [w_fc.astype(jnp.bfloat16).astype(jnp.float32), b_fc]
    return out


def simple_spi10_ref(x, params):
    """Pure-JAX reference (textbook two-pass BN) for a sanity check."""
    n_blocks = len(_block_dims())
    idx = 0
    h = x.astype(jnp.float32)
    for _ in range(n_blocks):
        w, b, gamma, beta = params[idx:idx + 4]
        idx += 4
        h = h @ w + b
        h = _gelu_exact(h)
        mean = jnp.mean(h, axis=0, keepdims=True)
        var = jnp.mean((h - mean) ** 2, axis=0, keepdims=True)
        h = (h - mean) * jax.lax.rsqrt(var + BN_EPS) * gamma + beta
    return h @ params[idx] + params[idx + 1]


if __name__ == "__main__":
    key = jax.random.PRNGKey(0)
    key, kx = jax.random.split(key)
    batch = 8
    x = jax.random.normal(kx, (batch, IN_NODE), jnp.float32)

    params = init_params(jax.random.PRNGKey(0))

    # One-time packing; W/P slabs stay device-resident across calls.
    W, P = pack_params(params)
    fwd = jax.jit(simple_spi10_pallas)

    out = jax.block_until_ready(fwd(x, W, P))

    # Reference uses the SAME bf16-rounded weights the kernel consumes, so the
    # check isolates kernel-math parity from the deliberate weight quantization.
    ref = simple_spi10_ref(x, _round_linear_weights_to_bf16(params))

    assert out.shape == (batch, 2), out.shape
    assert jnp.max(jnp.abs(out - ref)) < 2e-3, "mismatch vs reference"

    print("KERNEL_OK")
</pallas_src>

<mosaic_0001>
module attributes {stable_mosaic.version = 11 : i64} {
  func.func @kernel(%arg0: memref<8x128xf32, #tpu.memory_space<vmem>>, %arg1: memref<9x128x128xbf16, #tpu.memory_space<any>>, %arg2: memref<9x3x128xf32, #tpu.memory_space<vmem>>, %arg3: memref<8x128xf32, #tpu.memory_space<vmem>>, %arg4: memref<8x128xf32, #tpu.memory_space<vmem>>, %arg5: memref<2x128x128xbf16, #tpu.memory_space<vmem>>, %arg6: memref<2x!tpu.dma_semaphore, #tpu.memory_space<semaphore_mem>>) attributes {dimension_semantics = [], scalar_prefetch = 0 : i64, scratch_operands = 3 : i64, tpu.core_type = #tpu.core_type<tc>} {
    %c0_i32 = arith.constant 0 : i32
    %c0_i32_0 = arith.constant 0 : i32
    %c0_i32_1 = arith.constant 0 : i32
    %c0_i32_2 = arith.constant 0 : i32
    %c0_i32_3 = arith.constant 0 : i32
    %0 = tpu.memref_slice %arg1[%c0_i32, %c0_i32_2, %c0_i32_3] : memref<9x128x128xbf16, #tpu.memory_space<any>> -> memref<1x128x128xbf16, #tpu.memory_space<any>>
    %1 = tpu.memref_squeeze %0 : memref<1x128x128xbf16, #tpu.memory_space<any>> -> memref<128x128xbf16, #tpu.memory_space<any>>
    %c0_i32_4 = arith.constant 0 : i32
    %c0_i32_5 = arith.constant 0 : i32
    %2 = tpu.memref_slice %arg5[%c0_i32_0, %c0_i32_4, %c0_i32_5] : memref<2x128x128xbf16, #tpu.memory_space<vmem>> -> memref<1x128x128xbf16, #tpu.memory_space<vmem>>
    %3 = tpu.memref_squeeze %2 : memref<1x128x128xbf16, #tpu.memory_space<vmem>> -> memref<128x128xbf16, #tpu.memory_space<vmem>>
    %4 = tpu.memref_slice %arg6[%c0_i32_1] : memref<2x!tpu.dma_semaphore, #tpu.memory_space<semaphore_mem>> -> memref<1x!tpu.dma_semaphore, #tpu.memory_space<semaphore_mem>>
    %5 = tpu.memref_squeeze %4 : memref<1x!tpu.dma_semaphore, #tpu.memory_space<semaphore_mem>> -> memref<!tpu.dma_semaphore, #tpu.memory_space<semaphore_mem>>
    tpu.enqueue_dma source(%1 : memref<128x128xbf16, #tpu.memory_space<any>>) target(%3 : memref<128x128xbf16, #tpu.memory_space<vmem>>) target_semaphore(%5 : memref<!tpu.dma_semaphore, #tpu.memory_space<semaphore_mem>>)
    %c0 = arith.constant 0 : index
    %c0_6 = arith.constant 0 : index
    %6 = vector.load %arg0[%c0, %c0_6] : memref<8x128xf32, #tpu.memory_space<vmem>>, vector<8x128xf32>
    %c0_7 = arith.constant 0 : index
    %c0_8 = arith.constant 0 : index
    %7 = vector.load %arg4[%c0_7, %c0_8] : memref<8x128xf32, #tpu.memory_space<vmem>>, vector<8x128xf32>
    tpu.vector_store %arg4[%c0_7, %c0_8], %6 {strides = array<i32>} : memref<8x128xf32, #tpu.memory_space<vmem>>, vector<8x128xf32>,
    %c0_i32_9 = arith.constant 0 : i32
    %c8_i32 = arith.constant 8 : i32
    %8 = arith.addi %c0_i32_9, %c8_i32 : i32
    %c1_i32 = arith.constant 1 : i32
    scf.for %arg7 = %c0_i32_9 to %8 step %c1_i32  : i32 {
      %c1_i32_27 = arith.constant 1 : i32
      %26 = arith.muli %arg7, %c1_i32_27 : i32
      %c0_i32_28 = arith.constant 0 : i32
      %27 = arith.addi %c0_i32_28, %26 : i32
      %c2_i32 = arith.constant 2 : i32
      %c0_i32_29 = arith.constant 0 : i32
      %28 = arith.cmpi eq, %c2_i32, %c0_i32_29 : i32
      %c1_i32_30 = arith.constant 1 : i32
      %29 = arith.select %28, %c1_i32_30, %c2_i32 : i32
      %30 = arith.remsi %27, %29 : i32
      %c0_i32_31 = arith.constant 0 : i32
      %31 = arith.cmpi ne, %30, %c0_i32_31 : i32
      %c0_i32_32 = arith.constant 0 : i32
      %32 = arith.cmpi slt, %30, %c0_i32_32 : i32
      %c0_i32_33 = arith.constant 0 : i32
      %33 = arith.cmpi slt, %29, %c0_i32_33 : i32
      %34 = arith.xori %32, %33 : i1
      %35 = arith.andi %34, %31 : i1
      %36 = arith.addi %30, %29 : i32
      %37 = arith.select %35, %36, %30 : i32
      %c1_i32_34 = arith.constant 1 : i32
      %38 = arith.subi %c1_i32_34, %37 : i32
      %c0_i32_35 = arith.constant 0 : i32
      %c0_i32_36 = arith.constant 0 : i32
      %39 = tpu.memref_slice %arg1[%27, %c0_i32_35, %c0_i32_36] : memref<9x128x128xbf16, #tpu.memory_space<any>> -> memref<1x128x128xbf16, #tpu.memory_space<any>>
      %40 = tpu.memref_squeeze %39 : memref<1x128x128xbf16, #tpu.memory_space<any>> -> memref<128x128xbf16, #tpu.memory_space<any>>
      %c0_i32_37 = arith.constant 0 : i32
      %c0_i32_38 = arith.constant 0 : i32
      %41 = tpu.memref_slice %arg5[%37, %c0_i32_37, %c0_i32_38] : memref<2x128x128xbf16, #tpu.memory_space<vmem>> -> memref<1x128x128xbf16, #tpu.memory_space<vmem>>
      %42 = tpu.memref_squeeze %41 : memref<1x128x128xbf16, #tpu.memory_space<vmem>> -> memref<128x128xbf16, #tpu.memory_space<vmem>>
      %43 = tpu.memref_slice %arg6[%37] : memref<2x!tpu.dma_semaphore, #tpu.memory_space<semaphore_mem>> -> memref<1x!tpu.dma_semaphore, #tpu.memory_space<semaphore_mem>>
      %44 = tpu.memref_squeeze %43 : memref<1x!tpu.dma_semaphore, #tpu.memory_space<semaphore_mem>> -> memref<!tpu.dma_semaphore, #tpu.memory_space<semaphore_mem>>
      tpu.wait_dma2 semaphore(%44 : memref<!tpu.dma_semaphore, #tpu.memory_space<semaphore_mem>>) src(%40 : memref<128x128xbf16, #tpu.memory_space<any>>) dst(%42 : memref<128x128xbf16, #tpu.memory_space<vmem>>)
      %c1_i32_39 = arith.constant 1 : i32
      %45 = arith.addi %27, %c1_i32_39 : i32
      %c0_i32_40 = arith.constant 0 : i32
      %c0_i32_41 = arith.constant 0 : i32
      %46 = tpu.memref_slice %arg1[%45, %c0_i32_40, %c0_i32_41] : memref<9x128x128xbf16, #tpu.memory_space<any>> -> memref<1x128x128xbf16, #tpu.memory_space<any>>
      %47 = tpu.memref_squeeze %46 : memref<1x128x128xbf16, #tpu.memory_space<any>> -> memref<128x128xbf16, #tpu.memory_space<any>>
      %c0_i32_42 = arith.constant 0 : i32
      %c0_i32_43 = arith.constant 0 : i32
      %48 = tpu.memref_slice %arg5[%38, %c0_i32_42, %c0_i32_43] : memref<2x128x128xbf16, #tpu.memory_space<vmem>> -> memref<1x128x128xbf16, #tpu.memory_space<vmem>>
      %49 = tpu.memref_squeeze %48 : memref<1x128x128xbf16, #tpu.memory_space<vmem>> -> memref<128x128xbf16, #tpu.memory_space<vmem>>
      %50 = tpu.memref_slice %arg6[%38] : memref<2x!tpu.dma_semaphore, #tpu.memory_space<semaphore_mem>> -> memref<1x!tpu.dma_semaphore, #tpu.memory_space<semaphore_mem>>
      %51 = tpu.memref_squeeze %50 : memref<1x!tpu.dma_semaphore, #tpu.memory_space<semaphore_mem>> -> memref<!tpu.dma_semaphore, #tpu.memory_space<semaphore_mem>>
      tpu.enqueue_dma source(%47 : memref<128x128xbf16, #tpu.memory_space<any>>) target(%49 : memref<128x128xbf16, #tpu.memory_space<vmem>>) target_semaphore(%51 : memref<!tpu.dma_semaphore, #tpu.memory_space<semaphore_mem>>)
      %52 = arith.index_cast %27 : i32 to index
      %c0_44 = arith.constant 0 : index
      %c0_45 = arith.constant 0 : index
      %53 = vector.load %arg2[%52, %c0_44, %c0_45] : memref<9x3x128xf32, #tpu.memory_space<vmem>>, vector<1x3x128xf32>
      %54 = vector.shape_cast %53 : vector<1x3x128xf32> to vector<3x128xf32>
      %55 = vector.extract_strided_slice %54 {offsets = [0, 0], sizes = [1, 128], strides = [1, 1]} : vector<3x128xf32> to vector<1x128xf32>
      %56 = vector.extract_strided_slice %54 {offsets = [1, 0], sizes = [1, 128], strides = [1, 1]} : vector<3x128xf32> to vector<1x128xf32>
      %57 = vector.extract_strided_slice %54 {offsets = [2, 0], sizes = [1, 128], strides = [1, 1]} : vector<3x128xf32> to vector<1x128xf32>
      %c0_46 = arith.constant 0 : index
      %c0_47 = arith.constant 0 : index
      %58 = vector.load %arg4[%c0_46, %c0_47] : memref<8x128xf32, #tpu.memory_space<vmem>>, vector<8x128xf32>
      %59 = arith.index_cast %37 : i32 to index
      %c0_48 = arith.constant 0 : index
      %c0_49 = arith.constant 0 : index
      %60 = vector.load %arg5[%59, %c0_48, %c0_49] : memref<2x128x128xbf16, #tpu.memory_space<vmem>>, vector<1x128x128xbf16>
      %61 = vector.shape_cast %60 : vector<1x128x128xbf16> to vector<128x128xbf16>
      %62 = arith.extf %61 : vector<128x128xbf16> to vector<128x128xf32>
      %cst_50 = arith.constant dense<0.000000e+00> : vector<8x128xf32>
      %63 = tpu.matmul %58, %62, %cst_50 {dimension_numbers = #tpu.dot_dimension_numbers<[1], [0], [0], [1], [0, 0, 1, 1], [], []>} : vector<8x128xf32>, vector<128x128xf32>, vector<8x128xf32> -> vector<8x128xf32>
      %64 = vector.broadcast %55 : vector<1x128xf32> to vector<8x128xf32>
      %65 = arith.addf %63, %64 : vector<8x128xf32>
      %cst_51 = arith.constant 5.000000e-01 : f32
      %66 = vector.broadcast %cst_51 : f32 to vector<8x128xf32>
      %67 = arith.mulf %66, %65 : vector<8x128xf32>
      %cst_52 = arith.constant 0.707106769 : f32
      %68 = vector.broadcast %cst_52 : f32 to vector<8x128xf32>
      %69 = arith.mulf %65, %68 : vector<8x128xf32>
      %70 = math.erf %69 : vector<8x128xf32>
      %cst_53 = arith.constant 1.000000e+00 : f32
      %71 = vector.broadcast %cst_53 : f32 to vector<8x128xf32>
      %72 = arith.addf %71, %70 : vector<8x128xf32>
      %73 = arith.mulf %67, %72 : vector<8x128xf32>
      %cst_54 = arith.constant dense<0.000000e+00> : vector<128xf32>
      %74 = vector.multi_reduction <add>, %73, %cst_54 [0] : vector<8x128xf32> to vector<128xf32>
      %75 = vector.shape_cast %74 : vector<128xf32> to vector<1x128xf32>
      %76 = arith.mulf %73, %73 : vector<8x128xf32>
      %cst_55 = arith.constant dense<0.000000e+00> : vector<128xf32>
      %77 = vector.multi_reduction <add>, %76, %cst_55 [0] : vector<8x128xf32> to vector<128xf32>
      %78 = vector.shape_cast %77 : vector<128xf32> to vector<1x128xf32>
      %cst_56 = arith.constant 1.250000e-01 : f32
      %79 = vector.broadcast %cst_56 : f32 to vector<1x128xf32>
      %80 = arith.mulf %75, %79 : vector<1x128xf32>
      %cst_57 = arith.constant 1.250000e-01 : f32
      %81 = vector.broadcast %cst_57 : f32 to vector<1x128xf32>
      %82 = arith.mulf %78, %81 : vector<1x128xf32>
      %83 = arith.mulf %80, %80 : vector<1x128xf32>
      %84 = arith.subf %82, %83 : vector<1x128xf32>
      %cst_58 = arith.constant 0.000000e+00 : f32
      %85 = vector.broadcast %cst_58 : f32 to vector<1x128xf32>
      %86 = arith.maximumf %84, %85 : vector<1x128xf32>
      %cst_59 = arith.constant 9.99999974E-6 : f32
      %87 = vector.broadcast %cst_59 : f32 to vector<1x128xf32>
      %88 = arith.addf %86, %87 : vector<1x128xf32>
      %89 = math.rsqrt %88 : vector<1x128xf32>
      %90 = arith.mulf %56, %89 : vector<1x128xf32>
      %91 = arith.mulf %80, %90 : vector<1x128xf32>
      %92 = arith.subf %57, %91 : vector<1x128xf32>
      %93 = vector.broadcast %90 : vector<1x128xf32> to vector<8x128xf32>
      %94 = arith.mulf %73, %93 : vector<8x128xf32>
      %95 = vector.broadcast %92 : vector<1x128xf32> to vector<8x128xf32>
      %96 = arith.addf %94, %95 : vector<8x128xf32>
      %c0_60 = arith.constant 0 : index
      %c0_61 = arith.constant 0 : index
      %97 = vector.load %arg4[%c0_60, %c0_61] : memref<8x128xf32, #tpu.memory_space<vmem>>, vector<8x128xf32>
      tpu.vector_store %arg4[%c0_60, %c0_61], %96 {strides = array<i32>} : memref<8x128xf32, #tpu.memory_space<vmem>>, vector<8x128xf32>,
    }
    %c8_i32_10 = arith.constant 8 : i32
    %c8_i32_11 = arith.constant 8 : i32
    %c0_i32_12 = arith.constant 0 : i32
    %c0_i32_13 = arith.constant 0 : i32
    %c0_i32_14 = arith.constant 0 : i32
    %c0_i32_15 = arith.constant 0 : i32
    %9 = tpu.memref_slice %arg1[%c8_i32_11, %c0_i32_14, %c0_i32_15] : memref<9x128x128xbf16, #tpu.memory_space<any>> -> memref<1x128x128xbf16, #tpu.memory_space<any>>
    %10 = tpu.memref_squeeze %9 : memref<1x128x128xbf16, #tpu.memory_space<any>> -> memref<128x128xbf16, #tpu.memory_space<any>>
    %c0_i32_16 = arith.constant 0 : i32
    %c0_i32_17 = arith.constant 0 : i32
    %11 = tpu.memref_slice %arg5[%c0_i32_12, %c0_i32_16, %c0_i32_17] : memref<2x128x128xbf16, #tpu.memory_space<vmem>> -> memref<1x128x128xbf16, #tpu.memory_space<vmem>>
    %12 = tpu.memref_squeeze %11 : memref<1x128x128xbf16, #tpu.memory_space<vmem>> -> memref<128x128xbf16, #tpu.memory_space<vmem>>
    %13 = tpu.memref_slice %arg6[%c0_i32_13] : memref<2x!tpu.dma_semaphore, #tpu.memory_space<semaphore_mem>> -> memref<1x!tpu.dma_semaphore, #tpu.memory_space<semaphore_mem>>
    %14 = tpu.memref_squeeze %13 : memref<1x!tpu.dma_semaphore, #tpu.memory_space<semaphore_mem>> -> memref<!tpu.dma_semaphore, #tpu.memory_space<semaphore_mem>>
    tpu.wait_dma2 semaphore(%14 : memref<!tpu.dma_semaphore, #tpu.memory_space<semaphore_mem>>) src(%10 : memref<128x128xbf16, #tpu.memory_space<any>>) dst(%12 : memref<128x128xbf16, #tpu.memory_space<vmem>>)
    %c0_18 = arith.constant 0 : index
    %c0_19 = arith.constant 0 : index
    %c0_20 = arith.constant 0 : index
    %15 = vector.load %arg5[%c0_18, %c0_19, %c0_20] : memref<2x128x128xbf16, #tpu.memory_space<vmem>>, vector<1x128x128xbf16>
    %16 = vector.shape_cast %15 : vector<1x128x128xbf16> to vector<128x128xbf16>
    %17 = arith.extf %16 : vector<128x128xbf16> to vector<128x128xf32>
    %c8 = arith.constant 8 : index
    %c0_21 = arith.constant 0 : index
    %c0_22 = arith.constant 0 : index
    %18 = vector.load %arg2[%c8, %c0_21, %c0_22] : memref<9x3x128xf32, #tpu.memory_space<vmem>>, vector<1x3x128xf32>
    %19 = vector.shape_cast %18 : vector<1x3x128xf32> to vector<3x128xf32>
    %20 = vector.extract_strided_slice %19 {offsets = [0, 0], sizes = [1, 128], strides = [1, 1]} : vector<3x128xf32> to vector<1x128xf32>
    %c0_23 = arith.constant 0 : index
    %c0_24 = arith.constant 0 : index
    %21 = vector.load %arg4[%c0_23, %c0_24] : memref<8x128xf32, #tpu.memory_space<vmem>>, vector<8x128xf32>
    %cst = arith.constant dense<0.000000e+00> : vector<8x128xf32>
    %22 = tpu.matmul %21, %17, %cst {dimension_numbers = #tpu.dot_dimension_numbers<[1], [0], [0], [1], [0, 0, 1, 1], [], []>} : vector<8x128xf32>, vector<128x128xf32>, vector<8x128xf32> -> vector<8x128xf32>
    %23 = vector.broadcast %20 : vector<1x128xf32> to vector<8x128xf32>
    %24 = arith.addf %22, %23 : vector<8x128xf32>
    %c0_25 = arith.constant 0 : index
    %c0_26 = arith.constant 0 : index
    %25 = vector.load %arg3[%c0_25, %c0_26] : memref<8x128xf32, #tpu.memory_space<vmem>>, vector<8x128xf32>
    tpu.vector_store %arg3[%c0_25, %c0_26], %24 {strides = array<i32>} : memref<8x128xf32, #tpu.memory_space<vmem>>, vector<8x128xf32>,
    return
  }
}

</mosaic_0001>

<llo_original>
// kernel: simple_spi10_pallas.1
$region0: #{simple_spi10_pallas.1}
  #allocation0 [shape = 'u32[]', space=smem, size = 0x4, offset = 0x4, fixed_abs, tag = 'smem constant byte address 0x4 - core index']
  #allocation1 [shape = 'u32[144,128]{1,0:T(1,128)}', space=vmem, size = 0x12000, scoped, tag = 'internal scratch']
  #allocation2 [shape = 'f32[8,128]{1,0:T(8,128)}', space=vmem, size = 0x1000, scoped, tag = 'scratch operand']
  #allocation3 [shape = 'bf16[2,128,128]{2,1,0:T(8,128)(2,1)}', space=vmem, size = 0x10000, scoped, tag = 'scratch operand']
  #allocation4 [shape = 's32[2]{0}', space=sflag, size = 0x8, scoped, tag = 'scratch operand']
  #allocation5 [shape = 's32[]', space=sflag, size = 0x4, offset = 0, fixed_abs, tag = 'sflag constant byte address 0x0 - dummy sync flag']
  #allocation6 [shape = 's32[]', space=sflag, size = 0x4, offset = 0, fixed_abs, tag = 'sflag constant byte address 0x0 - dummy sync flag']
  #allocation7 [shape = 'u32[]', space=smem, size = 0x4, offset = 0x44, fixed_abs, tag = 'smem constant byte address 0x44 - assertion arg 0']
  #allocation8 [shape = 'u32[]', space=smem, size = 0x4, offset = 0x48, fixed_abs, tag = 'smem constant byte address 0x48 - assertion arg 1']
  #allocation9 [shape = 's32[]', space=sflag, size = 0x4, offset = 0, fixed_abs, tag = 'sflag constant byte address 0x0 - dummy sync flag']
  #allocation10 [shape = 's32[]', space=sflag, size = 0x4, offset = 0, fixed_abs, tag = 'sflag constant byte address 0x0 - dummy sync flag']
  %s0 = inlined_call_operand.vmem [shape: f32[8,128], index: 0, kind: input, shape index: {}]
  %s1 = inlined_call_operand.hbm [shape: bf16[9,128,128], index: 1, kind: input, shape index: {}]
  %s2 = inlined_call_operand.vmem [shape: f32[9,3,128], index: 2, kind: input, shape index: {}]
  %s3 = inlined_call_operand.vmem [shape: f32[8,128], index: 3, kind: output, shape index: {}]
  %s4 = sld [smem:[#allocation0]]
  $region33: #{simple_spi10_pallas.1} parent=0
    _
  %s6 = ssub.s32 1, %s4
  %s7 = scalar_select 0, %s6, %s4
  // Predicated region
  $region2: #{simple_spi10_pallas.1} parent=0 // pred_check
    _
  $region3: #{simple_spi10_pallas.1} parent=0 // pred_check_branch
    %9 = sbr.rel (0) target = $region5
  $region4: #{simple_spi10_pallas.1} parent=0 // pred_region
    _
  $region5: #{simple_spi10_pallas.1} parent=0 // pred_fallthru
    _
  // Predicated region
  $region6: #{simple_spi10_pallas.1} parent=0 // pred_check
    _
  $region7: #{simple_spi10_pallas.1} parent=0 // pred_check_branch
    %11 = sbr.rel (0) target = $region9
  $region8: #{simple_spi10_pallas.1} parent=0 // pred_region
    _
  $region9: #{simple_spi10_pallas.1} parent=0 // pred_fallthru
    _
  // Predicated region
  $region10: #{simple_spi10_pallas.1} parent=0 // pred_check
    _
  $region11: #{simple_spi10_pallas.1} parent=0 // pred_check_branch
    %13 = sbr.rel target = $region13
  $region12: #{simple_spi10_pallas.1} parent=0 // pred_region
    %14 = sst [smem:[#allocation7]] [#allocation6]
    %15 = sst [smem:[#allocation8]] [#allocation5]
  $region13: #{simple_spi10_pallas.1} parent=0 // pred_fallthru
    _
  %17 = shalt.err (0)
  %s19 = sshll.u32 [#allocation3], 4
  %s20 = int_to_ptr.vmem [resolvable:$true] %s19
  %22 = dma.hbm_to_vmem [thread:$0]  %s1, 1024, %s20, [#allocation4]
  %v23 = vld [vmem:[%s0] sm:$0xff]
  %24 = vst [vmem:[#allocation2] sm:$0xff] %v23
  loop: start=0, step=1, limit=8
  $region14: #{simple_spi10_pallas.1} parent=0 // loop_pre_header
    _
  $region15: #{simple_spi10_pallas.1} parent=0 // loop_header
    %s26 = sphi 0, %s30
    %p27 = scmp.ge.s32.totalorder %s26, 8
  $region16: #{simple_spi10_pallas.1} parent=0 // loop_header_branch
    %29 = sbr.rel (%p27) target = $region20
  $region17: #{simple_spi10_pallas.1} parent=0 // loop_body
    %p31 = scmp.lt.s32.totalorder %s26, 0
    %s32 = ssub.s32 0, %s26
    %s33 = scalar_select %p31, %s32, %s26
    %s34 = sand.u32 %s33, 1
    %s35 = ssub.s32 0, %s34
    %s36 = scalar_select %p31, %s35, %s34
    %p37 = scmp.ne.s32.totalorder %s36, 0
    %p38 = scmp.lt.s32.totalorder %s36, 0
    %p39 = pnand %p38, %p37
    %p40 = pneg %p39
    %s41 = sadd.s32 %s36, 2
    %s42 = scalar_select %p40, %s41, %s36
    %s43 = ssub.s32 1, %s42
    %s44 = smul.u32 %s42, 16
    %s45 = smul.addr %s44, 4
    %s46 = scalar_lea.vmem [#allocation3], %s45
    %s47 = scalar_lea.sflag [#allocation4], %s42
    %s48 = smul.u32 4, 16
    %s49 = smul.u32 %s48, 1
    %s50 = sshll.u32 %s49, 4
    %51 = dma.done %s47, %s50
    %s52 = sadd.s32 %s26, 1
    %s53 = smul.u32 %s52, 16
    %s54 = smul.addr %s53, 64
    %s55 = scalar_lea.hbm %s1, %s54
    %s56 = smul.u32 %s43, 16
    %s57 = smul.addr %s56, 4
    %s58 = scalar_lea.vmem [#allocation3], %s57
    %s59 = scalar_lea.sflag [#allocation4], %s43
    // Predicated region
    $region21: #{simple_spi10_pallas.1} parent=17 // pred_check
      _
    $region22: #{simple_spi10_pallas.1} parent=17 // pred_check_branch
      %61 = sbr.rel target = $region24
    $region23: #{simple_spi10_pallas.1} parent=17 // pred_region
      %62 = sst [smem:[#allocation7]] [#allocation10]
      %63 = sst [smem:[#allocation8]] [#allocation9]
    $region24: #{simple_spi10_pallas.1} parent=17 // pred_fallthru
      _
    %65 = shalt.err (0)
    %s67 = sshll.u32 %s58, 4
    %s68 = int_to_ptr.vmem [resolvable:$true] %s67
    %70 = dma.hbm_to_vmem [thread:$0]  %s55, 1024, %s68, %s59
    %s71 = smul.u32 %s26, 4
    %s72 = scalar_lea.vmem %s2, %s71
    %v73 = vld [vmem:[%s72] sm:$0x7]
    %v74 = vld [vmem:[#allocation2] sm:$0xff]
    %v75 = vld [vmem:[%s46] sm:$0xf]
    %v76 = vld [vmem:[%s46 + $0x4] sm:$0xf]
    %v77 = vld [vmem:[%s46 + $0x8] sm:$0xf]
    %v78 = vld [vmem:[%s46 + $0xc] sm:$0xf]
    %v79 = vld [vmem:[%s46 + $0x10] sm:$0xf]
    %v80 = vld [vmem:[%s46 + $0x14] sm:$0xf]
    %v81 = vld [vmem:[%s46 + $0x18] sm:$0xf]
    %v82 = vld [vmem:[%s46 + $0x1c] sm:$0xf]
    %v83 = vld [vmem:[%s46 + $0x20] sm:$0xf]
    %v84 = vld [vmem:[%s46 + $0x24] sm:$0xf]
    %v85 = vld [vmem:[%s46 + $0x28] sm:$0xf]
    %v86 = vld [vmem:[%s46 + $0x2c] sm:$0xf]
    %v87 = vld [vmem:[%s46 + $0x30] sm:$0xf]
    %v88 = vld [vmem:[%s46 + $0x34] sm:$0xf]
    %v89 = vld [vmem:[%s46 + $0x38] sm:$0xf]
    %v90 = vld [vmem:[%s46 + $0x3c] sm:$0xf]
    %v91 = vunpack.c.l.bf16 %v75
    %v92 = vunpack.c.l.bf16 %v76
    %v93 = vunpack.c.l.bf16 %v77
    %v94 = vunpack.c.l.bf16 %v78
    %v95 = vunpack.c.l.bf16 %v79
    %v96 = vunpack.c.l.bf16 %v80
    %v97 = vunpack.c.l.bf16 %v81
    %v98 = vunpack.c.l.bf16 %v82
    %v99 = vunpack.c.l.bf16 %v83
    %v100 = vunpack.c.l.bf16 %v84
    %v101 = vunpack.c.l.bf16 %v85
    %v102 = vunpack.c.l.bf16 %v86
    %v103 = vunpack.c.l.bf16 %v87
    %v104 = vunpack.c.l.bf16 %v88
    %v105 = vunpack.c.l.bf16 %v89
    %v106 = vunpack.c.l.bf16 %v90
    %v107 = vlaneseq
    %v108 = vshrl.u32 %v107, 7
    %v109 = vsub.s32 0, %v108
    %v110 = vrot.slane %v73, %v109
    %111 = vmatprep.subr.mxu0 0.0
    %112 = vmatpush1.msra.mxu0 %v106
    %113 = vmatprep.subr.mxu0 0.0
    %114 = vmatpush1.msra.mxu0 %v105
    %115 = vmatprep.subr.mxu0 0.0
    %116 = vmatpush1.msra.mxu0 %v104
    %117 = vmatprep.subr.mxu0 0.0
    %118 = vmatpush1.msra.mxu0 %v103
    %119 = vmatprep.subr.mxu0 0.0
    %120 = vmatpush1.msra.mxu0 %v102
    %121 = vmatprep.subr.mxu0 0.0
    %122 = vmatpush1.msra.mxu0 %v101
    %123 = vmatprep.subr.mxu0 0.0
    %124 = vmatpush1.msra.mxu0 %v100
    %125 = vmatprep.subr.mxu0 0.0
    %126 = vmatpush1.msra.mxu0 %v99
    %127 = vmatprep.subr.mxu0 0.0
    %128 = vmatpush1.msra.mxu0 %v98
    %129 = vmatprep.subr.mxu0 0.0
    %130 = vmatpush1.msra.mxu0 %v97
    %131 = vmatprep.subr.mxu0 0.0
    %132 = vmatpush1.msra.mxu0 %v96
    %133 = vmatprep.subr.mxu0 0.0
    %134 = vmatpush1.msra.mxu0 %v95
    %135 = vmatprep.subr.mxu0 0.0
    %136 = vmatpush1.msra.mxu0 %v94
    %137 = vmatprep.subr.mxu0 0.0
    %138 = vmatpush1.msra.mxu0 %v93
    %139 = vmatprep.subr.mxu0 0.0
    %140 = vmatpush1.msra.mxu0 %v92
    %141 = vmatprep.subr.mxu0 0.0
    %142 = vmatpush1.msra.mxu0 %v91
    %143 = vmatprep.subr.mxu0 0.0
    %144 = vmatpush2.msra.mxu0 0.0
    %145 = vmatprep.subr.mxu0 0.0
    %146 = vmatpush2.msra.mxu0 0.0
    %147 = vmatprep.subr.mxu0 0.0
    %148 = vmatpush2.msra.mxu0 0.0
    %149 = vmatprep.subr.mxu0 0.0
    %150 = vmatpush2.msra.mxu0 0.0
    %151 = vmatprep.subr.mxu0 0.0
    %152 = vmatpush2.msra.mxu0 0.0
    %153 = vmatprep.subr.mxu0 0.0
    %154 = vmatpush2.msra.mxu0 0.0
    %155 = vmatprep.subr.mxu0 0.0
    %156 = vmatpush2.msra.mxu0 0.0
    %157 = vmatprep.subr.mxu0 0.0
    %158 = vmatpush2.msra.mxu0 0.0
    %159 = vmatprep.subr.mxu0 0.0
    %160 = vmatpush2.msra.mxu0 0.0
    %161 = vmatprep.subr.mxu0 0.0
    %162 = vmatpush2.msra.mxu0 0.0
    %163 = vmatprep.subr.mxu0 0.0
    %164 = vmatpush2.msra.mxu0 0.0
    %165 = vmatprep.subr.mxu0 0.0
    %166 = vmatpush2.msra.mxu0 0.0
    %167 = vmatprep.subr.mxu0 0.0
    %168 = vmatpush2.msra.mxu0 0.0
    %169 = vmatprep.subr.mxu0 0.0
    %170 = vmatpush2.msra.mxu0 0.0
    %171 = vmatprep.subr.mxu0 0.0
    %172 = vmatpush2.msra.mxu0 0.0
    %173 = vmatprep.subr.mxu0 0.0
    %174 = vmatpush2.msra.mxu0 0.0
    %175 = vmatprep.mubr.f32.mxu0 0.0
    %176 = vmatmul.mubr.f32.gmra.mxu0 %v74
    %v177 = vpop.f32.mrf.mxu0
    %v178 = vadd.f32 %v110, %v177
    %v179 = vpop.f32.mrf.mxu0
    %180 = vdwg.mxu0
    %v181 = vmul.f32 %v178, 0.5
    %v182 = vmul.f32 %v178, 0.70710677
    %v183 = verf.f32.pop %v182
    %v184 = vadd.f32 %v183, 1.0
    %v185 = vmul.f32 %v181, %v184
    %v186 = vrot.slane %v185, 4
    %v187 = vadd.f32 %v185, %v186
    %v188 = vrot.slane %v187, 2
    %v189 = vadd.f32 %v187, %v188
    %v190 = vrot.slane %v189, 1
    %v191 = vadd.f32 %v189, %v190
    %v192 = vmul.f32 %v185, %v185
    %v193 = vrot.slane %v192, 4
    %v194 = vadd.f32 %v192, %v193
    %v195 = vrot.slane %v194, 2
    %v196 = vadd.f32 %v194, %v195
    %v197 = vrot.slane %v196, 1
    %v198 = vadd.f32 %v196, %v197
    %v199 = vmul.f32 %v191, 0.125
    %v200 = vmul.f32 %v198, 0.125
    %v201 = vmul.f32 %v199, %v199
    %v202 = vsub.f32 %v200, %v201
    %v203 = vmax.f32 %v202, 0.0
    %v204 = vadd.f32 %v203, 1e-05
    %v205 = vrsqrt.pop %v204
    %v206 = vmul.f32 %v73, %v205
    %v207 = vmul.f32 %v199, %v206
    %v209 = vrot.slane %v207, 7
    %v211 = vsub.f32 %v73, %v209
    %v212 = vlaneseq
    %v213 = vshrl.u32 %v212, 7
    %v214 = vsub.s32 1, %v213
    %v215 = vrot.slane %v206, %v214
    %v216 = vmul.f32 %v185, %v215
    %v217 = vlaneseq
    %v218 = vshrl.u32 %v217, 7
    %v219 = vsub.s32 2, %v218
    %v220 = vrot.slane %v211, %v219
    %v221 = vadd.f32 %v216, %v220
    %222 = vst [vmem:[#allocation2] sm:$0xff] %v221
  $region18: #{simple_spi10_pallas.1} parent=0 // loop_footer
    %s30 = sadd.s32 1, %s26
  $region19: #{simple_spi10_pallas.1} parent=0 // loop_footer_branch
    %25 = sbr.rel target = $region15
  $region20: #{simple_spi10_pallas.1} parent=0 // loop_exit
    _
  %s223 = smul.u32 4, 16
  %s224 = smul.u32 %s223, 1
  %s225 = sshll.u32 %s224, 4
  %226 = dma.done [#allocation4], %s225
  %v227 = vld [vmem:[#allocation3] sm:$0xf]
  %v228 = vld [vmem:[#allocation3 + $0x4] sm:$0xf]
  %v229 = vld [vmem:[#allocation3 + $0x8] sm:$0xf]
  %v230 = vld [vmem:[#allocation3 + $0xc] sm:$0xf]
  %v231 = vld [vmem:[#allocation3 + $0x10] sm:$0xf]
  %v232 = vld [vmem:[#allocation3 + $0x14] sm:$0xf]
  %v233 = vld [vmem:[#allocation3 + $0x18] sm:$0xf]
  %v234 = vld [vmem:[#allocation3 + $0x1c] sm:$0xf]
  %v235 = vld [vmem:[#allocation3 + $0x20] sm:$0xf]
  %v236 = vld [vmem:[#allocation3 + $0x24] sm:$0xf]
  %v237 = vld [vmem:[#allocation3 + $0x28] sm:$0xf]
  %v238 = vld [vmem:[#allocation3 + $0x2c] sm:$0xf]
  %v239 = vld [vmem:[#allocation3 + $0x30] sm:$0xf]
  %v240 = vld [vmem:[#allocation3 + $0x34] sm:$0xf]
  %v241 = vld [vmem:[#allocation3 + $0x38] sm:$0xf]
  %v242 = vld [vmem:[#allocation3 + $0x3c] sm:$0xf]
  %v243 = vunpack.c.l.bf16 %v227
  %v244 = vunpack.c.l.bf16 %v228
  %v245 = vunpack.c.l.bf16 %v229
  %v246 = vunpack.c.l.bf16 %v230
  %v247 = vunpack.c.l.bf16 %v231
  %v248 = vunpack.c.l.bf16 %v232
  %v249 = vunpack.c.l.bf16 %v233
  %v250 = vunpack.c.l.bf16 %v234
  %v251 = vunpack.c.l.bf16 %v235
  %v252 = vunpack.c.l.bf16 %v236
  %v253 = vunpack.c.l.bf16 %v237
  %v254 = vunpack.c.l.bf16 %v238
  %v255 = vunpack.c.l.bf16 %v239
  %v256 = vunpack.c.l.bf16 %v240
  %v257 = vunpack.c.l.bf16 %v241
  %v258 = vunpack.c.l.bf16 %v242
  %s259 = scalar_lea.vmem %s2, 32
  %v260 = vld [vmem:[%s259] sm:$0x7]
  %v261 = vld [vmem:[#allocation2] sm:$0xff]
  %v262 = vlaneseq
  %v263 = vshrl.u32 %v262, 7
  %v264 = vsub.s32 0, %v263
  %v265 = vrot.slane %v260, %v264
  %266 = vmatprep.subr.mxu0 0.0
  %267 = vmatpush1.msra.mxu0 %v258
  %268 = vmatprep.subr.mxu0 0.0
  %269 = vmatpush1.msra.mxu0 %v257
  %270 = vmatprep.subr.mxu0 0.0
  %271 = vmatpush1.msra.mxu0 %v256
  %272 = vmatprep.subr.mxu0 0.0
  %273 = vmatpush1.msra.mxu0 %v255
  %274 = vmatprep.subr.mxu0 0.0
  %275 = vmatpush1.msra.mxu0 %v254
  %276 = vmatprep.subr.mxu0 0.0
  %277 = vmatpush1.msra.mxu0 %v253
  %278 = vmatprep.subr.mxu0 0.0
  %279 = vmatpush1.msra.mxu0 %v252
  %280 = vmatprep.subr.mxu0 0.0
  %281 = vmatpush1.msra.mxu0 %v251
  %282 = vmatprep.subr.mxu0 0.0
  %283 = vmatpush1.msra.mxu0 %v250
  %284 = vmatprep.subr.mxu0 0.0
  %285 = vmatpush1.msra.mxu0 %v249
  %286 = vmatprep.subr.mxu0 0.0
  %287 = vmatpush1.msra.mxu0 %v248
  %288 = vmatprep.subr.mxu0 0.0
  %289 = vmatpush1.msra.mxu0 %v247
  %290 = vmatprep.subr.mxu0 0.0
  %291 = vmatpush1.msra.mxu0 %v246
  %292 = vmatprep.subr.mxu0 0.0
  %293 = vmatpush1.msra.mxu0 %v245
  %294 = vmatprep.subr.mxu0 0.0
  %295 = vmatpush1.msra.mxu0 %v244
  %296 = vmatprep.subr.mxu0 0.0
  %297 = vmatpush1.msra.mxu0 %v243
  %298 = vmatprep.subr.mxu0 0.0
  %299 = vmatpush2.msra.mxu0 0.0
  %300 = vmatprep.subr.mxu0 0.0
  %301 = vmatpush2.msra.mxu0 0.0
  %302 = vmatprep.subr.mxu0 0.0
  %303 = vmatpush2.msra.mxu0 0.0
  %304 = vmatprep.subr.mxu0 0.0
  %305 = vmatpush2.msra.mxu0 0.0
  %306 = vmatprep.subr.mxu0 0.0
  %307 = vmatpush2.msra.mxu0 0.0
  %308 = vmatprep.subr.mxu0 0.0
  %309 = vmatpush2.msra.mxu0 0.0
  %310 = vmatprep.subr.mxu0 0.0
  %311 = vmatpush2.msra.mxu0 0.0
  %312 = vmatprep.subr.mxu0 0.0
  %313 = vmatpush2.msra.mxu0 0.0
  %314 = vmatprep.subr.mxu0 0.0
  %315 = vmatpush2.msra.mxu0 0.0
  %316 = vmatprep.subr.mxu0 0.0
  %317 = vmatpush2.msra.mxu0 0.0
  %318 = vmatprep.subr.mxu0 0.0
  %319 = vmatpush2.msra.mxu0 0.0
  %320 = vmatprep.subr.mxu0 0.0
  %321 = vmatpush2.msra.mxu0 0.0
  %322 = vmatprep.subr.mxu0 0.0
  %323 = vmatpush2.msra.mxu0 0.0
  %324 = vmatprep.subr.mxu0 0.0
  %325 = vmatpush2.msra.mxu0 0.0
  %326 = vmatprep.subr.mxu0 0.0
  %327 = vmatpush2.msra.mxu0 0.0
  %328 = vmatprep.subr.mxu0 0.0
  %329 = vmatpush2.msra.mxu0 0.0
  %330 = vmatprep.mubr.f32.mxu0 0.0
  %331 = vmatmul.mubr.f32.gmra.mxu0 %v261
  %v332 = vpop.f32.mrf.mxu0
  %v333 = vadd.f32 %v265, %v332
  %v334 = vpop.f32.mrf.mxu0
  %335 = vdwg.mxu0
  %336 = vst [vmem:[%s3] sm:$0xff] %v333
  // Predicated region
  $region25: #{simple_spi10_pallas.1} parent=0 // pred_check
    _
  $region26: #{simple_spi10_pallas.1} parent=0 // pred_check_branch
    %338 = sbr.rel (0) target = $region28
  $region27: #{simple_spi10_pallas.1} parent=0 // pred_region
    _
  $region28: #{simple_spi10_pallas.1} parent=0 // pred_fallthru
    _
  // Predicated region
  $region29: #{simple_spi10_pallas.1} parent=0 // pred_check
    _
  $region30: #{simple_spi10_pallas.1} parent=0 // pred_check_branch
    %340 = sbr.rel (0) target = $region32
  $region31: #{simple_spi10_pallas.1} parent=0 // pred_region
    _
  $region32: #{simple_spi10_pallas.1} parent=0 // pred_fallthru
    _
  %341 = vsyncmov [#allocation4]
  %s342 = vpop.sfrf %341
  %p343 = scmp.eq.s32.totalorder %s342, 0
  %p344 = pneg %p343
  %346 = shalt.err (%p344)
  %s347 = scalar_lea.sflag [#allocation4], 1
  %348 = vsyncmov %s347
  %s349 = vpop.sfrf %348
  %p350 = scmp.eq.s32.totalorder %s349, 0
  %p351 = pneg %p350
  %353 = shalt.err (%p351)

</llo_original>
